<compile_context>
chip_gen: v6e
topology: v6e:2x2x1
jax: 0.10.0
libtpu: 0.0.40
codegen_flags: <defaults>
</compile_context>

<pallas_src>
import jax
import jax.numpy as jnp
from jax.experimental import pallas as pl
from jax.experimental.pallas import tpu as pltpu

C_OUT = 8
KSIZE = 5
HW = 28
K_IN = HW * HW            # 784
N1, N2, N3 = 164, 84, 7
N_PAD = 128               # lane-dense padded output width


# ---------------------------------------------------------------------------
# Fused forward kernel: ONE MXU matmul + bias on a batch tile.
# ---------------------------------------------------------------------------
def mlp_fused_kernel(x_ref, w_ref, b_ref, o_ref):
    # x_ref: (tb, 784)  f32   flattened input images
    # w_ref: (784, 128) bf16  fully folded conv+linear1+linear2+linear3 weight
    # b_ref: (1, 128)   f32   fully folded bias (cols >= 7 are zero)
    # o_ref: (tb, 128)  f32   lane-dense output (cols >= 7 are zero)
    x = x_ref[...].astype(w_ref.dtype)                        # cheap VPU cast to bf16
    o_ref[...] = (jnp.dot(x, w_ref[...], preferred_element_type=jnp.float32)
                  + b_ref[...]).astype(o_ref.dtype)


def _round_up(v, m):
    return -(-v // m) * m


def _pick_batch_tile(B):
    # Small B: one full-batch block (block dims equal to full array dims satisfy
    # the (8,128) rule).  Moderate B: split into >=2 blocks so the "parallel"
    # axis can shard across v7x's two TensorCores.  Large B: cap tile at 512 to
    # amortize the ~0.35 us per-grid-step overhead while keeping VMEM trivial.
    if B <= 8:
        return B
    if B <= 1024:
        return max(8, _round_up(pl.cdiv(B, 2), 8))
    return 512


def fused_mlp(x_flat, w_fold, b_fold):
    B = x_flat.shape[0]
    tb = _pick_batch_tile(B)
    nb = pl.cdiv(B, tb)
    const = lambda i: (0, 0)                 # weights/bias: same block every step
    return pl.pallas_call(
        mlp_fused_kernel,
        out_shape=jax.ShapeDtypeStruct((B, N_PAD), jnp.float32),
        grid=(nb,),
        in_specs=[
            pl.BlockSpec((tb, K_IN), lambda i: (i, 0)),
            pl.BlockSpec(w_fold.shape, const),
            pl.BlockSpec(b_fold.shape, const),
        ],
        out_specs=pl.BlockSpec((tb, N_PAD), lambda i: (i, 0)),
        compiler_params=pltpu.CompilerParams(
            dimension_semantics=("parallel",)),
    )(x_flat, w_fold, b_fold)


# ---------------------------------------------------------------------------
# Parameters (deterministic synthetic init — shapes match the PyTorch module).
# ---------------------------------------------------------------------------
def init_params(key):
    ks = jax.random.split(key, 8)
    s = 0.05
    return dict(
        conv_w=jax.random.normal(ks[0], (C_OUT, 1, KSIZE, KSIZE), jnp.float32) * s,
        conv_b=jax.random.normal(ks[1], (C_OUT,), jnp.float32) * s,
        w1=jax.random.normal(ks[2], (N1, HW * HW * C_OUT), jnp.float32) * s,
        b1=jax.random.normal(ks[3], (N1,), jnp.float32) * s,
        w2=jax.random.normal(ks[4], (N2, N1), jnp.float32) * s,
        b2=jax.random.normal(ks[5], (N2,), jnp.float32) * s,
        w3=jax.random.normal(ks[6], (N3, N2), jnp.float32) * s,
        b3=jax.random.normal(ks[7], (N3,), jnp.float32) * s,
    )


def prepare_params(params):
    """One-time weight preparation (outside the jitted forward):
    1. Fold the conv (weights + bias + zero padding) exactly into linear1:
         h1[b,n] = sum_{ih,iw} x[b,ih,iw] * A[n,ih,iw] + c1[n]
    2. Since there are no nonlinearities, fold linear2 and linear3 in as well:
         Wfold = A.T @ W2.T @ W3.T  (784,7),  bfold = c1@W2.T@W3.T + b2@W3.T + b3
    3. Zero-pad the 7-wide output to 128 lanes (lane-dense stores) and cast the
       folded weight to bf16 (native MXU input dtype)."""
    conv_w = params["conv_w"][:, 0]                     # (8, 5, 5)
    conv_b = params["conv_b"]                           # (8,)
    w1r = params["w1"].reshape(N1, C_OUT, HW, HW)       # NCHW flatten order

    A = jnp.zeros((N1, HW, HW), jnp.float32)
    for kh in range(KSIZE):
        for kw in range(KSIZE):
            dh, dw = kh - 2, kw - 2
            oh0, oh1 = max(0, -dh), HW - max(0, dh)
            ow0, ow1 = max(0, -dw), HW - max(0, dw)
            contrib = jnp.einsum("c,nchw->nhw", conv_w[:, kh, kw],
                                 w1r[:, :, oh0:oh1, ow0:ow1])
            A = A.at[:, oh0 + dh:oh1 + dh, ow0 + dw:ow1 + dw].add(contrib)
    c1 = params["b1"] + jnp.einsum("nchw,c->n", w1r, conv_b)   # folded bias (164,)

    w2t = params["w2"].T                                # (164, 84)
    w3t = params["w3"].T                                # (84, 7)
    w_fold = A.reshape(N1, K_IN).T @ w2t @ w3t          # (784, 7) f32
    b_fold = c1 @ w2t @ w3t + params["b2"] @ w3t + params["b3"]   # (7,)

    w_pad = jnp.zeros((K_IN, N_PAD), jnp.float32).at[:, :N3].set(w_fold)
    b_pad = jnp.zeros((1, N_PAD), jnp.float32).at[0, :N3].set(b_fold)
    return dict(
        w_fold=w_pad.astype(jnp.bfloat16),              # (784, 128) bf16
        b_fold=b_pad,                                   # (1, 128)   f32
    )


@jax.jit
def mlp_forward(x, prepped):
    # x: (B, 1, 28, 28) PyTorch NCHW; single input channel -> flatten is free.
    B = x.shape[0]
    x_flat = x.reshape(B, K_IN)
    out_pad = fused_mlp(x_flat, prepped["w_fold"], prepped["b_fold"])
    return out_pad[:, :N3]


def reference_forward(x, params):
    # Pure-JAX reference of the PyTorch forward (unfused, raw parameters).
    y = jax.lax.conv_general_dilated(
        x, params["conv_w"], window_strides=(1, 1),
        padding=((2, 2), (2, 2)),
        dimension_numbers=("NCHW", "OIHW", "NCHW"))
    y = y + params["conv_b"].reshape(1, -1, 1, 1)
    y = y.reshape(x.shape[0], -1)
    y = y @ params["w1"].T + params["b1"]
    y = y @ params["w2"].T + params["b2"]
    y = y @ params["w3"].T + params["b3"]
    return y


if __name__ == "__main__":
    key = jax.random.PRNGKey(0)
    k_x, k_p = jax.random.split(key)
    # Linear(28*28*8, ...) fixes spatial size to 28x28 and in_channels to 1.
    x = jax.random.normal(k_x, (2, 1, 28, 28), jnp.float32)
    params = init_params(k_p)
    prepped = prepare_params(params)        # one-time full affine fold (f32)

    out = jax.block_until_ready(mlp_forward(x, prepped))
    assert out.shape == (2, N3), out.shape

    ref = reference_forward(x, params)
    assert jnp.allclose(out, ref, rtol=1e-2, atol=1e-2), (
        "mismatch vs reference", float(jnp.max(jnp.abs(out - ref))))

    print("KERNEL_OK")
</pallas_src>

<mosaic_0001>
module attributes {stable_mosaic.version = 11 : i64} {
  func.func @mlp_fused_kernel(%arg0: i32, %arg1: memref<2x784xf32, #tpu.memory_space<vmem>>, %arg2: memref<784x128xbf16, #tpu.memory_space<vmem>>, %arg3: memref<1x128xf32, #tpu.memory_space<vmem>>, %arg4: memref<2x128xf32, #tpu.memory_space<vmem>>) attributes {dimension_semantics = [#tpu.dimension_semantics<parallel>], iteration_bounds = array<i64: 1>, scalar_prefetch = 0 : i64, scratch_operands = 0 : i64, tpu.core_type = #tpu.core_type<tc>, window_params = [{transform_indices = @transform_0, window_bounds = array<i64: 2, 784>}, {pipeline_mode = #tpu.pipeline_mode<synchronous>, transform_indices = @transform_1, window_bounds = array<i64: 784, 128>}, {pipeline_mode = #tpu.pipeline_mode<synchronous>, transform_indices = @transform_2, window_bounds = array<i64: 1, 128>}, {transform_indices = @transform_3, window_bounds = array<i64: 2, 128>}]} {
    %c0 = arith.constant 0 : index
    %c0_0 = arith.constant 0 : index
    %0 = vector.load %arg1[%c0, %c0_0] : memref<2x784xf32, #tpu.memory_space<vmem>>, vector<2x784xf32>
    %1 = arith.truncf %0 : vector<2x784xf32> to vector<2x784xbf16>
    %c0_1 = arith.constant 0 : index
    %c0_2 = arith.constant 0 : index
    %2 = vector.load %arg2[%c0_1, %c0_2] : memref<784x128xbf16, #tpu.memory_space<vmem>>, vector<784x128xbf16>
    %cst = arith.constant dense<0.000000e+00> : vector<2x128xf32>
    %3 = tpu.matmul %1, %2, %cst {dimension_numbers = #tpu.dot_dimension_numbers<[1], [0], [0], [1], [0, 0, 1, 1], [], []>} : vector<2x784xbf16>, vector<784x128xbf16>, vector<2x128xf32> -> vector<2x128xf32>
    %c0_3 = arith.constant 0 : index
    %c0_4 = arith.constant 0 : index
    %4 = vector.load %arg3[%c0_3, %c0_4] : memref<1x128xf32, #tpu.memory_space<vmem>>, vector<1x128xf32>
    %5 = vector.broadcast %4 : vector<1x128xf32> to vector<2x128xf32>
    %6 = arith.addf %3, %5 : vector<2x128xf32>
    %c0_5 = arith.constant 0 : index
    %c0_6 = arith.constant 0 : index
    %7 = vector.load %arg4[%c0_5, %c0_6] : memref<2x128xf32, #tpu.memory_space<vmem>>, vector<2x128xf32>
    tpu.vector_store %arg4[%c0_5, %c0_6], %6 {strides = array<i32>} : memref<2x128xf32, #tpu.memory_space<vmem>>, vector<2x128xf32>,
    return
  }
  func.func @transform_0(%arg0: i32) -> (i32, i32) {
    %c0_i32 = arith.constant 0 : i32
    %c0_i32_0 = arith.constant 0 : i32
    return %arg0, %c0_i32 : i32, i32
  }
  func.func @transform_1(%arg0: i32) -> (i32, i32) {
    %c0_i32 = arith.constant 0 : i32
    %c0_i32_0 = arith.constant 0 : i32
    %c0_i32_1 = arith.constant 0 : i32
    return %c0_i32, %c0_i32_0 : i32, i32
  }
  func.func @transform_2(%arg0: i32) -> (i32, i32) {
    %c0_i32 = arith.constant 0 : i32
    %c0_i32_0 = arith.constant 0 : i32
    %c0_i32_1 = arith.constant 0 : i32
    return %c0_i32, %c0_i32_0 : i32, i32
  }
  func.func @transform_3(%arg0: i32) -> (i32, i32) {
    %c0_i32 = arith.constant 0 : i32
    %c0_i32_0 = arith.constant 0 : i32
    return %arg0, %c0_i32 : i32, i32
  }
}

</mosaic_0001>

<llo_original>
// kernel: mlp_forward.1
$region0: #{mlp_forward.1}
  #allocation0 [shape = 'u32[]', space=smem, size = 0x4, offset = 0x4, fixed_abs, tag = 'smem constant byte address 0x4 - core index']
  #allocation1 [shape = 'u32[144,128]{1,0:T(1,128)}', space=vmem, size = 0x12000, scoped, tag = 'internal scratch']
  %s0 = inlined_call_operand.vmem [shape: f32[2,784], index: 0, kind: input, shape index: {}]
  %s1 = inlined_call_operand.hbm [shape: bf16[784,128], index: 1, kind: input, shape index: {}]
  %s2 = inlined_call_operand.vmem [shape: f32[1,128], index: 2, kind: input, shape index: {}]
  %s3 = inlined_call_operand.hbm [shape: f32[2,128], index: 3, kind: output, shape index: {}]
  %s4 = sld [smem:[#allocation0]]
  $region26: #{mlp_forward.1} parent=0
    _
  %s6 = ssub.s32 1, %s4
  %s7 = scalar_select 0, %s6, %s4
  $region1: #{mlp_forward.1} parent=0
    #allocation2 [shape = 'u8[200704]{0}', space=vmem, size = 0x31000, scoped, tag = 'input window, operand 1, single buffered']
    #allocation3 [shape = 's32[1]{0}', space=sflag, size = 0x4, scoped, tag = 'scoped memory for mlp_forward.1']
    #allocation4 [shape = 's32[1]{0}', space=sflag, size = 0x4, scoped, tag = 'scoped memory for mlp_forward.1']
    #allocation5 [shape = 'u8[1024]{0}', space=vmem, size = 0x400, scoped, tag = 'output window, operand 0, single buffered']
    %8 = vsyncpa [#allocation3], 0
    %9 = vsyncpa [#allocation4], 0
    // Predicated region
    $region2: #{mlp_forward.1} parent=1 // pred_check
      _
    $region3: #{mlp_forward.1} parent=1 // pred_check_branch
      %11 = sbr.rel (0) target = $region5
    $region4: #{mlp_forward.1} parent=1 // pred_region
      _
    $region5: #{mlp_forward.1} parent=1 // pred_fallthru
      _
    // Predicated region
    $region6: #{mlp_forward.1} parent=1 // pred_check
      _
    $region7: #{mlp_forward.1} parent=1 // pred_check_branch
      %13 = sbr.rel (0) target = $region9
    $region8: #{mlp_forward.1} parent=1 // pred_region
      %s15 = ssub.s32 6272, 6272
      %16 = vsyncadd [#allocation3], %s15
      %s17 = sshll.u32 [#allocation2], 4
      %s18 = int_to_ptr.vmem [resolvable:$true] %s17
      %23 = dma.hbm_to_vmem [thread:$0]  %s1, 6272, %s18, [#allocation3], 64, 64, 4
    $region9: #{mlp_forward.1} parent=1 // pred_fallthru
      _
    // Predicated region
    $region10: #{mlp_forward.1} parent=1 // pred_check
      _
    $region11: #{mlp_forward.1} parent=1 // pred_check_branch
      %25 = sbr.rel (0) target = $region13
    $region12: #{mlp_forward.1} parent=1 // pred_region
      _
    $region13: #{mlp_forward.1} parent=1 // pred_fallthru
      _
    // Predicated region
    $region14: #{mlp_forward.1} parent=1 // pred_check
      _
    $region15: #{mlp_forward.1} parent=1 // pred_check_branch
      %27 = sbr.rel (0) target = $region17
    $region16: #{mlp_forward.1} parent=1 // pred_region
      %28 = dma.done [#allocation3], 6272
    $region17: #{mlp_forward.1} parent=1 // pred_fallthru
      _
    %v30 = vld [vmem:[%s0] sm:$0xff]
    %v31 = vld [vmem:[%s0 + $0x8] sm:$0x3f]
    %v34 = vcombine.high %v30, %v30
    %v36 = vunpack.c.l.s4 1983009808
    %v37 = vunpack.c.0.s8 %v36
    %v38 = vlaneseq
    %v39 = vshrl.u32 %v38, 7
    %v40 = vsub.s32 %v37, %v39
    %v41 = vrot.slane %v30, %v40
    %v43 = vunpack.c.l.s4 1983009808
    %v44 = vunpack.c.0.s8 %v43
    %v45 = vlaneseq
    %v46 = vshrl.u32 %v45, 7
    %v47 = vsub.s32 %v44, %v46
    %v48 = vrot.slane %v34, %v47
    %v49 = vcombine.high %v41, %v41
    %v50 = vcombine.high %v48, %v48
    %v51 = vcombine.high %v31, %v31
    %v53 = vunpack.c.l.s4 1983009808
    %v54 = vunpack.c.0.s8 %v53
    %v55 = vlaneseq
    %v56 = vshrl.u32 %v55, 7
    %v57 = vsub.s32 %v54, %v56
    %v58 = vrot.slane %v31, %v57
    %v60 = vunpack.c.l.s4 1983009808
    %v61 = vunpack.c.0.s8 %v60
    %v62 = vlaneseq
    %v63 = vshrl.u32 %v62, 7
    %v64 = vsub.s32 %v61, %v63
    %v65 = vrot.slane %v51, %v64
    %v66 = vcombine.high %v58, %v58
    %v74 = vpack.c.bf16 %v41, %v41
    %v75 = vpack.c.bf16 %v49, %v49
    %v76 = vpack.c.bf16 %v48, %v48
    %v77 = vpack.c.bf16 %v50, %v50
    %v78 = vpack.c.bf16 %v58, %v58
    %v79 = vpack.c.bf16 %v66, %v66
    %v80 = vpack.c.bf16 %v65, %v65
    %v81 = vld [vmem:[#allocation2] sm:$0xf]
    %v82 = vld [vmem:[#allocation2 + $0x4] sm:$0xf]
    %v83 = vld [vmem:[#allocation2 + $0x8] sm:$0xf]
    %v84 = vld [vmem:[#allocation2 + $0xc] sm:$0xf]
    %v85 = vld [vmem:[#allocation2 + $0x10] sm:$0xf]
    %v86 = vld [vmem:[#allocation2 + $0x14] sm:$0xf]
    %v87 = vld [vmem:[#allocation2 + $0x18] sm:$0xf]
    %v88 = vld [vmem:[#allocation2 + $0x1c] sm:$0xf]
    %v89 = vld [vmem:[#allocation2 + $0x20] sm:$0xf]
    %v90 = vld [vmem:[#allocation2 + $0x24] sm:$0xf]
    %v91 = vld [vmem:[#allocation2 + $0x28] sm:$0xf]
    %v92 = vld [vmem:[#allocation2 + $0x2c] sm:$0xf]
    %v93 = vld [vmem:[#allocation2 + $0x30] sm:$0xf]
    %v94 = vld [vmem:[#allocation2 + $0x34] sm:$0xf]
    %v95 = vld [vmem:[#allocation2 + $0x38] sm:$0xf]
    %v96 = vld [vmem:[#allocation2 + $0x3c] sm:$0xf]
    %v97 = vld [vmem:[#allocation2 + $0x40] sm:$0xf]
    %v98 = vld [vmem:[#allocation2 + $0x44] sm:$0xf]
    %v99 = vld [vmem:[#allocation2 + $0x48] sm:$0xf]
    %v100 = vld [vmem:[#allocation2 + $0x4c] sm:$0xf]
    %v101 = vld [vmem:[#allocation2 + $0x50] sm:$0xf]
    %v102 = vld [vmem:[#allocation2 + $0x54] sm:$0xf]
    %v103 = vld [vmem:[#allocation2 + $0x58] sm:$0xf]
    %v104 = vld [vmem:[#allocation2 + $0x5c] sm:$0xf]
    %v105 = vld [vmem:[#allocation2 + $0x60] sm:$0xf]
    %v106 = vld [vmem:[#allocation2 + $0x64] sm:$0xf]
    %v107 = vld [vmem:[#allocation2 + $0x68] sm:$0xf]
    %v108 = vld [vmem:[#allocation2 + $0x6c] sm:$0xf]
    %v109 = vld [vmem:[#allocation2 + $0x70] sm:$0xf]
    %v110 = vld [vmem:[#allocation2 + $0x74] sm:$0xf]
    %v111 = vld [vmem:[#allocation2 + $0x78] sm:$0xf]
    %v112 = vld [vmem:[#allocation2 + $0x7c] sm:$0xf]
    %v113 = vld [vmem:[#allocation2 + $0x80] sm:$0xf]
    %v114 = vld [vmem:[#allocation2 + $0x84] sm:$0xf]
    %v115 = vld [vmem:[#allocation2 + $0x88] sm:$0xf]
    %v116 = vld [vmem:[#allocation2 + $0x8c] sm:$0xf]
    %v117 = vld [vmem:[#allocation2 + $0x90] sm:$0xf]
    %v118 = vld [vmem:[#allocation2 + $0x94] sm:$0xf]
    %v119 = vld [vmem:[#allocation2 + $0x98] sm:$0xf]
    %v120 = vld [vmem:[#allocation2 + $0x9c] sm:$0xf]
    %v121 = vld [vmem:[#allocation2 + $0xa0] sm:$0xf]
    %v122 = vld [vmem:[#allocation2 + $0xa4] sm:$0xf]
    %v123 = vld [vmem:[#allocation2 + $0xa8] sm:$0xf]
    %v124 = vld [vmem:[#allocation2 + $0xac] sm:$0xf]
    %v125 = vld [vmem:[#allocation2 + $0xb0] sm:$0xf]
    %v126 = vld [vmem:[#allocation2 + $0xb4] sm:$0xf]
    %v127 = vld [vmem:[#allocation2 + $0xb8] sm:$0xf]
    %v128 = vld [vmem:[#allocation2 + $0xbc] sm:$0xf]
    %v129 = vld [vmem:[#allocation2 + $0xc0] sm:$0xf]
    %v130 = vld [vmem:[#allocation2 + $0xc4] sm:$0xf]
    %v131 = vld [vmem:[#allocation2 + $0xc8] sm:$0xf]
    %v132 = vld [vmem:[#allocation2 + $0xcc] sm:$0xf]
    %v133 = vld [vmem:[#allocation2 + $0xd0] sm:$0xf]
    %v134 = vld [vmem:[#allocation2 + $0xd4] sm:$0xf]
    %v135 = vld [vmem:[#allocation2 + $0xd8] sm:$0xf]
    %v136 = vld [vmem:[#allocation2 + $0xdc] sm:$0xf]
    %v137 = vld [vmem:[#allocation2 + $0xe0] sm:$0xf]
    %v138 = vld [vmem:[#allocation2 + $0xe4] sm:$0xf]
    %v139 = vld [vmem:[#allocation2 + $0xe8] sm:$0xf]
    %v140 = vld [vmem:[#allocation2 + $0xec] sm:$0xf]
    %v141 = vld [vmem:[#allocation2 + $0xf0] sm:$0xf]
    %v142 = vld [vmem:[#allocation2 + $0xf4] sm:$0xf]
    %v143 = vld [vmem:[#allocation2 + $0xf8] sm:$0xf]
    %v144 = vld [vmem:[#allocation2 + $0xfc] sm:$0xf]
    %v145 = vld [vmem:[#allocation2 + $0x100] sm:$0xf]
    %v146 = vld [vmem:[#allocation2 + $0x104] sm:$0xf]
    %v147 = vld [vmem:[#allocation2 + $0x108] sm:$0xf]
    %v148 = vld [vmem:[#allocation2 + $0x10c] sm:$0xf]
    %v149 = vld [vmem:[#allocation2 + $0x110] sm:$0xf]
    %v150 = vld [vmem:[#allocation2 + $0x114] sm:$0xf]
    %v151 = vld [vmem:[#allocation2 + $0x118] sm:$0xf]
    %v152 = vld [vmem:[#allocation2 + $0x11c] sm:$0xf]
    %v153 = vld [vmem:[#allocation2 + $0x120] sm:$0xf]
    %v154 = vld [vmem:[#allocation2 + $0x124] sm:$0xf]
    %v155 = vld [vmem:[#allocation2 + $0x128] sm:$0xf]
    %v156 = vld [vmem:[#allocation2 + $0x12c] sm:$0xf]
    %v157 = vld [vmem:[#allocation2 + $0x130] sm:$0xf]
    %v158 = vld [vmem:[#allocation2 + $0x134] sm:$0xf]
    %v159 = vld [vmem:[#allocation2 + $0x138] sm:$0xf]
    %v160 = vld [vmem:[#allocation2 + $0x13c] sm:$0xf]
    %v161 = vld [vmem:[#allocation2 + $0x140] sm:$0xf]
    %v162 = vld [vmem:[#allocation2 + $0x144] sm:$0xf]
    %v163 = vld [vmem:[#allocation2 + $0x148] sm:$0xf]
    %v164 = vld [vmem:[#allocation2 + $0x14c] sm:$0xf]
    %v165 = vld [vmem:[#allocation2 + $0x150] sm:$0xf]
    %v166 = vld [vmem:[#allocation2 + $0x154] sm:$0xf]
    %v167 = vld [vmem:[#allocation2 + $0x158] sm:$0xf]
    %v168 = vld [vmem:[#allocation2 + $0x15c] sm:$0xf]
    %v169 = vld [vmem:[#allocation2 + $0x160] sm:$0xf]
    %v170 = vld [vmem:[#allocation2 + $0x164] sm:$0xf]
    %v171 = vld [vmem:[#allocation2 + $0x168] sm:$0xf]
    %v172 = vld [vmem:[#allocation2 + $0x16c] sm:$0xf]
    %v173 = vld [vmem:[#allocation2 + $0x170] sm:$0xf]
    %v174 = vld [vmem:[#allocation2 + $0x174] sm:$0xf]
    %v175 = vld [vmem:[#allocation2 + $0x178] sm:$0xf]
    %v176 = vld [vmem:[#allocation2 + $0x17c] sm:$0xf]
    %v177 = vld [vmem:[#allocation2 + $0x180] sm:$0xf]
    %v178 = vld [vmem:[#allocation2 + $0x184] sm:$0xf]
    %v179 = vld [vmem:[%s2] sm:$0x1]
    %v181 = vlaneseq
    %v182 = vshrl.u32 %v181, 7
    %v183 = vsub.s32 0, %v182
    %v184 = vrot.slane %v179, %v183
    %v284 = vunpack.c.l.b16 %v81
    %v285 = vunpack.c.l.b16 %v82
    %v286 = vunpack.c.l.b16 %v83
    %v287 = vunpack.c.l.b16 %v84
    %v288 = vunpack.c.l.b16 %v85
    %v289 = vunpack.c.l.b16 %v86
    %v290 = vunpack.c.l.b16 %v87
    %v291 = vunpack.c.l.b16 %v88
    %v292 = vunpack.c.l.b16 %v89
    %v293 = vunpack.c.l.b16 %v90
    %v294 = vunpack.c.l.b16 %v91
    %v295 = vunpack.c.l.b16 %v92
    %v296 = vunpack.c.l.b16 %v93
    %v297 = vunpack.c.l.b16 %v94
    %v298 = vunpack.c.l.b16 %v95
    %v299 = vunpack.c.l.b16 %v96
    %v300 = vunpack.c.l.b16 %v97
    %v301 = vunpack.c.l.b16 %v98
    %v302 = vunpack.c.l.b16 %v99
    %v303 = vunpack.c.l.b16 %v100
    %v304 = vunpack.c.l.b16 %v101
    %v305 = vunpack.c.l.b16 %v102
    %v306 = vunpack.c.l.b16 %v103
    %v307 = vunpack.c.l.b16 %v104
    %v308 = vunpack.c.l.b16 %v105
    %v309 = vunpack.c.l.b16 %v106
    %v310 = vunpack.c.l.b16 %v107
    %v311 = vunpack.c.l.b16 %v108
    %v312 = vunpack.c.l.b16 %v109
    %v313 = vunpack.c.l.b16 %v110
    %v314 = vunpack.c.l.b16 %v111
    %v315 = vunpack.c.l.b16 %v112
    %v316 = vunpack.c.l.b16 %v113
    %v317 = vunpack.c.l.b16 %v114
    %v318 = vunpack.c.l.b16 %v115
    %v319 = vunpack.c.l.b16 %v116
    %v320 = vunpack.c.l.b16 %v117
    %v321 = vunpack.c.l.b16 %v118
    %v322 = vunpack.c.l.b16 %v119
    %v323 = vunpack.c.l.b16 %v120
    %v324 = vunpack.c.l.b16 %v121
    %v325 = vunpack.c.l.b16 %v122
    %v326 = vunpack.c.l.b16 %v123
    %v327 = vunpack.c.l.b16 %v124
    %v328 = vunpack.c.l.b16 %v125
    %v329 = vunpack.c.l.b16 %v126
    %v330 = vunpack.c.l.b16 %v127
    %v331 = vunpack.c.l.b16 %v128
    %v332 = vunpack.c.l.b16 %v129
    %v333 = vunpack.c.l.b16 %v130
    %v334 = vunpack.c.l.b16 %v131
    %v335 = vunpack.c.l.b16 %v132
    %v336 = vunpack.c.l.b16 %v133
    %v337 = vunpack.c.l.b16 %v134
    %v338 = vunpack.c.l.b16 %v135
    %v339 = vunpack.c.l.b16 %v136
    %v340 = vunpack.c.l.b16 %v137
    %v341 = vunpack.c.l.b16 %v138
    %v342 = vunpack.c.l.b16 %v139
    %v343 = vunpack.c.l.b16 %v140
    %v344 = vunpack.c.l.b16 %v141
    %v345 = vunpack.c.l.b16 %v142
    %v346 = vunpack.c.l.b16 %v143
    %v347 = vunpack.c.l.b16 %v144
    %v348 = vunpack.c.l.b16 %v145
    %v349 = vunpack.c.l.b16 %v146
    %v350 = vunpack.c.l.b16 %v147
    %v351 = vunpack.c.l.b16 %v148
    %v352 = vunpack.c.l.b16 %v149
    %v353 = vunpack.c.l.b16 %v150
    %v354 = vunpack.c.l.b16 %v151
    %v355 = vunpack.c.l.b16 %v152
    %v356 = vunpack.c.l.b16 %v153
    %v357 = vunpack.c.l.b16 %v154
    %v358 = vunpack.c.l.b16 %v155
    %v359 = vunpack.c.l.b16 %v156
    %v360 = vunpack.c.l.b16 %v157
    %v361 = vunpack.c.l.b16 %v158
    %v362 = vunpack.c.l.b16 %v159
    %v363 = vunpack.c.l.b16 %v160
    %v364 = vunpack.c.l.b16 %v161
    %v365 = vunpack.c.l.b16 %v162
    %v366 = vunpack.c.l.b16 %v163
    %v367 = vunpack.c.l.b16 %v164
    %v368 = vunpack.c.l.b16 %v165
    %v369 = vunpack.c.l.b16 %v166
    %v370 = vunpack.c.l.b16 %v167
    %v371 = vunpack.c.l.b16 %v168
    %v372 = vunpack.c.l.b16 %v169
    %v373 = vunpack.c.l.b16 %v170
    %v374 = vunpack.c.l.b16 %v171
    %v375 = vunpack.c.l.b16 %v172
    %v376 = vunpack.c.l.b16 %v173
    %v377 = vunpack.c.l.b16 %v174
    %v378 = vunpack.c.l.b16 %v175
    %v379 = vunpack.c.l.b16 %v176
    %v380 = vunpack.c.l.b16 %v177
    %v381 = vunpack.c.l.b16 %v178
    %v382 = vpack.c.b16 %v285, %v284
    %v383 = vpack.c.b16 %v287, %v286
    %v384 = vpack.c.b16 %v289, %v288
    %v385 = vpack.c.b16 %v291, %v290
    %v386 = vpack.c.b16 %v293, %v292
    %v387 = vpack.c.b16 %v295, %v294
    %v388 = vpack.c.b16 %v297, %v296
    %v389 = vpack.c.b16 %v299, %v298
    %v390 = vpack.c.b16 %v301, %v300
    %v391 = vpack.c.b16 %v303, %v302
    %v392 = vpack.c.b16 %v305, %v304
    %v393 = vpack.c.b16 %v307, %v306
    %v394 = vpack.c.b16 %v309, %v308
    %v395 = vpack.c.b16 %v311, %v310
    %v396 = vpack.c.b16 %v313, %v312
    %v397 = vpack.c.b16 %v315, %v314
    %v398 = vpack.c.b16 %v317, %v316
    %v399 = vpack.c.b16 %v319, %v318
    %v400 = vpack.c.b16 %v321, %v320
    %v401 = vpack.c.b16 %v323, %v322
    %v402 = vpack.c.b16 %v325, %v324
    %v403 = vpack.c.b16 %v327, %v326
    %v404 = vpack.c.b16 %v329, %v328
    %v405 = vpack.c.b16 %v331, %v330
    %v406 = vpack.c.b16 %v333, %v332
    %v407 = vpack.c.b16 %v335, %v334
    %v408 = vpack.c.b16 %v337, %v336
    %v409 = vpack.c.b16 %v339, %v338
    %v410 = vpack.c.b16 %v341, %v340
    %v411 = vpack.c.b16 %v343, %v342
    %v412 = vpack.c.b16 %v345, %v344
    %v413 = vpack.c.b16 %v347, %v346
    %v414 = vpack.c.b16 %v349, %v348
    %v415 = vpack.c.b16 %v351, %v350
    %v416 = vpack.c.b16 %v353, %v352
    %v417 = vpack.c.b16 %v355, %v354
    %v418 = vpack.c.b16 %v357, %v356
    %v419 = vpack.c.b16 %v359, %v358
    %v420 = vpack.c.b16 %v361, %v360
    %v421 = vpack.c.b16 %v363, %v362
    %v422 = vpack.c.b16 %v365, %v364
    %v423 = vpack.c.b16 %v367, %v366
    %v424 = vpack.c.b16 %v369, %v368
    %v425 = vpack.c.b16 %v371, %v370
    %v426 = vpack.c.b16 %v373, %v372
    %v427 = vpack.c.b16 %v375, %v374
    %v428 = vpack.c.b16 %v377, %v376
    %v429 = vpack.c.b16 %v379, %v378
    %v430 = vpack.c.b16 %v381, %v380
    %vm480 = vcmask 130048
    %v482 = vsel %vm480, %v80, 0
    %484 = vmatprep.subr.bf16.mxu0 0
    %485 = vmatpush1.bf16.msra.mxu0 %v389
    %486 = vmatprep.subr.bf16.mxu0 0
    %487 = vmatpush1.bf16.msra.mxu0 %v388
    %488 = vmatprep.subr.bf16.mxu0 0
    %489 = vmatpush1.bf16.msra.mxu0 %v387
    %490 = vmatprep.subr.bf16.mxu0 0
    %491 = vmatpush1.bf16.msra.mxu0 %v386
    %492 = vmatprep.subr.bf16.mxu0 0
    %493 = vmatpush1.bf16.msra.mxu0 %v385
    %494 = vmatprep.subr.bf16.mxu0 0
    %495 = vmatpush1.bf16.msra.mxu0 %v384
    %496 = vmatprep.subr.bf16.mxu0 0
    %497 = vmatpush1.bf16.msra.mxu0 %v383
    %498 = vmatprep.subr.bf16.mxu0 0
    %499 = vmatpush1.bf16.msra.mxu0 %v382
    %500 = vmatprep.subr.bf16.mxu0 0
    %501 = vmatpush2.bf16.msra.mxu0 %v397
    %502 = vmatprep.subr.bf16.mxu0 0
    %503 = vmatpush2.bf16.msra.mxu0 %v396
    %504 = vmatprep.subr.bf16.mxu0 0
    %505 = vmatpush2.bf16.msra.mxu0 %v395
    %506 = vmatprep.subr.bf16.mxu0 0
    %507 = vmatpush2.bf16.msra.mxu0 %v394
    %508 = vmatprep.subr.bf16.mxu0 0
    %509 = vmatpush2.bf16.msra.mxu0 %v393
    %510 = vmatprep.subr.bf16.mxu0 0
    %511 = vmatpush2.bf16.msra.mxu0 %v392
    %512 = vmatprep.subr.bf16.mxu0 0
    %513 = vmatpush2.bf16.msra.mxu0 %v391
    %514 = vmatprep.subr.bf16.mxu0 0
    %515 = vmatpush2.bf16.msra.mxu0 %v390
    %516 = vmatprep.mubr.bf16.mxu0 %v75
    %517 = vmatmul.mubr.bf16.gmra.mxu0 %v74
    %v518 = vpop.f32.mrf.mxu0
    %v519 = vadd.f32 %v184, %v518
    %v520 = vpop.f32.mrf.mxu0
    %v521 = vpop.f32.mrf.mxu0
    %v522 = vpop.f32.mrf.mxu0
    %523 = vdwg.mxu0
    %524 = vmatprep.subr.bf16.mxu0 0
    %525 = vmatpush1.bf16.msra.mxu0 %v405
    %526 = vmatprep.subr.bf16.mxu0 0
    %527 = vmatpush1.bf16.msra.mxu0 %v404
    %528 = vmatprep.subr.bf16.mxu0 0
    %529 = vmatpush1.bf16.msra.mxu0 %v403
    %530 = vmatprep.subr.bf16.mxu0 0
    %531 = vmatpush1.bf16.msra.mxu0 %v402
    %532 = vmatprep.subr.bf16.mxu0 0
    %533 = vmatpush1.bf16.msra.mxu0 %v401
    %534 = vmatprep.subr.bf16.mxu0 0
    %535 = vmatpush1.bf16.msra.mxu0 %v400
    %536 = vmatprep.subr.bf16.mxu0 0
    %537 = vmatpush1.bf16.msra.mxu0 %v399
    %538 = vmatprep.subr.bf16.mxu0 0
    %539 = vmatpush1.bf16.msra.mxu0 %v398
    %540 = vmatprep.subr.bf16.mxu0 0
    %541 = vmatpush2.bf16.msra.mxu0 %v413
    %542 = vmatprep.subr.bf16.mxu0 0
    %543 = vmatpush2.bf16.msra.mxu0 %v412
    %544 = vmatprep.subr.bf16.mxu0 0
    %545 = vmatpush2.bf16.msra.mxu0 %v411
    %546 = vmatprep.subr.bf16.mxu0 0
    %547 = vmatpush2.bf16.msra.mxu0 %v410
    %548 = vmatprep.subr.bf16.mxu0 0
    %549 = vmatpush2.bf16.msra.mxu0 %v409
    %550 = vmatprep.subr.bf16.mxu0 0
    %551 = vmatpush2.bf16.msra.mxu0 %v408
    %552 = vmatprep.subr.bf16.mxu0 0
    %553 = vmatpush2.bf16.msra.mxu0 %v407
    %554 = vmatprep.subr.bf16.mxu0 0
    %555 = vmatpush2.bf16.msra.mxu0 %v406
    %556 = vmatprep.mubr.bf16.mxu0 %v77
    %557 = vmatmul.mubr.bf16.gmra.mxu0 %v76
    %v558 = vpop.f32.mrf.mxu0
    %v559 = vadd.f32 %v519, %v558
    %v560 = vpop.f32.mrf.mxu0
    %v561 = vpop.f32.mrf.mxu0
    %v562 = vpop.f32.mrf.mxu0
    %563 = vdwg.mxu0
    %564 = vmatprep.subr.bf16.mxu0 0
    %565 = vmatpush1.bf16.msra.mxu0 %v421
    %566 = vmatprep.subr.bf16.mxu0 0
    %567 = vmatpush1.bf16.msra.mxu0 %v420
    %568 = vmatprep.subr.bf16.mxu0 0
    %569 = vmatpush1.bf16.msra.mxu0 %v419
    %570 = vmatprep.subr.bf16.mxu0 0
    %571 = vmatpush1.bf16.msra.mxu0 %v418
    %572 = vmatprep.subr.bf16.mxu0 0
    %573 = vmatpush1.bf16.msra.mxu0 %v417
    %574 = vmatprep.subr.bf16.mxu0 0
    %575 = vmatpush1.bf16.msra.mxu0 %v416
    %576 = vmatprep.subr.bf16.mxu0 0
    %577 = vmatpush1.bf16.msra.mxu0 %v415
    %578 = vmatprep.subr.bf16.mxu0 0
    %579 = vmatpush1.bf16.msra.mxu0 %v414
    %580 = vmatprep.subr.bf16.mxu0 0
    %581 = vmatpush2.bf16.msra.mxu0 %v429
    %582 = vmatprep.subr.bf16.mxu0 0
    %583 = vmatpush2.bf16.msra.mxu0 %v428
    %584 = vmatprep.subr.bf16.mxu0 0
    %585 = vmatpush2.bf16.msra.mxu0 %v427
    %586 = vmatprep.subr.bf16.mxu0 0
    %587 = vmatpush2.bf16.msra.mxu0 %v426
    %588 = vmatprep.subr.bf16.mxu0 0
    %589 = vmatpush2.bf16.msra.mxu0 %v425
    %590 = vmatprep.subr.bf16.mxu0 0
    %591 = vmatpush2.bf16.msra.mxu0 %v424
    %592 = vmatprep.subr.bf16.mxu0 0
    %593 = vmatpush2.bf16.msra.mxu0 %v423
    %594 = vmatprep.subr.bf16.mxu0 0
    %595 = vmatpush2.bf16.msra.mxu0 %v422
    %596 = vmatprep.mubr.bf16.mxu0 %v79
    %597 = vmatmul.mubr.bf16.gmra.mxu0 %v78
    %v598 = vpop.f32.mrf.mxu0
    %v599 = vadd.f32 %v559, %v598
    %v600 = vpop.f32.mrf.mxu0
    %v601 = vpop.f32.mrf.mxu0
    %v602 = vpop.f32.mrf.mxu0
    %603 = vdwg.mxu0
    %604 = vmatprep.subr.bf16.mxu0 0
    %605 = vmatpush1.bf16.msra.mxu0 0
    %606 = vmatprep.subr.bf16.mxu0 0
    %607 = vmatpush1.bf16.msra.mxu0 0
    %608 = vmatprep.subr.bf16.mxu0 0
    %609 = vmatpush1.bf16.msra.mxu0 0
    %610 = vmatprep.subr.bf16.mxu0 0
    %611 = vmatpush1.bf16.msra.mxu0 0
    %612 = vmatprep.subr.bf16.mxu0 0
    %613 = vmatpush1.bf16.msra.mxu0 0
    %614 = vmatprep.subr.bf16.mxu0 0
    %615 = vmatpush1.bf16.msra.mxu0 0
    %616 = vmatprep.subr.bf16.mxu0 0
    %617 = vmatpush1.bf16.msra.mxu0 0
    %618 = vmatprep.subr.bf16.mxu0 0
    %619 = vmatpush1.bf16.msra.mxu0 %v430
    %620 = vmatprep.subr.bf16.mxu0 0
    %621 = vmatpush2.bf16.msra.mxu0 0
    %622 = vmatprep.subr.bf16.mxu0 0
    %623 = vmatpush2.bf16.msra.mxu0 0
    %624 = vmatprep.subr.bf16.mxu0 0
    %625 = vmatpush2.bf16.msra.mxu0 0
    %626 = vmatprep.subr.bf16.mxu0 0
    %627 = vmatpush2.bf16.msra.mxu0 0
    %628 = vmatprep.subr.bf16.mxu0 0
    %629 = vmatpush2.bf16.msra.mxu0 0
    %630 = vmatprep.subr.bf16.mxu0 0
    %631 = vmatpush2.bf16.msra.mxu0 0
    %632 = vmatprep.subr.bf16.mxu0 0
    %633 = vmatpush2.bf16.msra.mxu0 0
    %634 = vmatprep.subr.bf16.mxu0 0
    %635 = vmatpush2.bf16.msra.mxu0 0
    %636 = vmatprep.mubr.bf16.mxu0 0
    %637 = vmatmul.mubr.bf16.gmra.mxu0 %v482
    %v638 = vpop.f32.mrf.mxu0
    %v639 = vadd.f32 %v599, %v638
    %v640 = vpop.f32.mrf.mxu0
    %v641 = vpop.f32.mrf.mxu0
    %v642 = vpop.f32.mrf.mxu0
    %643 = vdwg.mxu0
    %644 = vst [vmem:[#allocation5] sm:$0x3] %v639
    // Predicated region
    $region18: #{mlp_forward.1} parent=1 // pred_check
      _
    $region19: #{mlp_forward.1} parent=1 // pred_check_branch
      %646 = sbr.rel (0) target = $region21
    $region20: #{mlp_forward.1} parent=1 // pred_region
      %s648 = ssub.s32 32, 32
      %649 = vsyncadd [#allocation4], %s648
      %s651 = sshll.u32 [#allocation5], 4
      %s652 = int_to_ptr.vmem [resolvable:$true] %s651
      %654 = dma.vmem_to_hbm [thread:$0]  %s652, 32, %s3, [#allocation4]
    $region21: #{mlp_forward.1} parent=1 // pred_fallthru
      _
    // Predicated region
    $region22: #{mlp_forward.1} parent=1 // pred_check
      _
    $region23: #{mlp_forward.1} parent=1 // pred_check_branch
      %656 = sbr.rel (0) target = $region25
    $region24: #{mlp_forward.1} parent=1 // pred_region
      %657 = dma.done [#allocation4], 32
    $region25: #{mlp_forward.1} parent=1 // pred_fallthru
      _
    %658 = vsyncpa [#allocation3], 1
    %659 = vsyncpa [#allocation4], 1

</llo_original>
